<compile_context>
chip_gen: v7x
topology: tpu7x:2x2x1
jax: 0.10.0
libtpu: 0.0.40
codegen_flags: <defaults>
</compile_context>

<pallas_src>
import functools

import jax
import jax.numpy as jnp
from jax.experimental import pallas as pl
from jax.experimental.pallas import tpu as pltpu


def _round_up(x: int, m: int) -> int:
    return ((x + m - 1) // m) * m


def _cdiv(a: int, b: int) -> int:
    return (a + b - 1) // b


def _critic_kernel(n_mid, *refs):
    """refs = (state, action, w0_s, w0_a, b0,
               [w_i, b_i] * n_mid,            # hidden->hidden layers
               w_last, b_last, out)           # final Linear(hidden, 1)
    """
    state_ref, action_ref = refs[0], refs[1]
    w0s_ref, w0a_ref, b0_ref = refs[2], refs[3], refs[4]
    w_last_ref = refs[5 + 2 * n_mid]   # [H_last, 1]
    b_last_ref = refs[6 + 2 * n_mid]   # [1, 1]
    out_ref = refs[-1]                 # [TB, 1]

    # Layer 0: split matmul on the two inputs (replaces host-side concat).
    h = (
        jnp.dot(state_ref[...], w0s_ref[...], preferred_element_type=jnp.float32)
        + jnp.dot(action_ref[...], w0a_ref[...], preferred_element_type=jnp.float32)
        + b0_ref[...]
    )
    h = jnp.maximum(h, 0.0)

    # Hidden layers: Linear + ReLU. Activations / bias / ReLU stay f32; the
    # MXU inputs are cast to the weight dtype (bf16 on the opt-in path).
    for layer in range(n_mid):
        w_ref = refs[5 + 2 * layer]
        b_ref = refs[6 + 2 * layer]
        h = (
            jnp.dot(h.astype(w_ref.dtype), w_ref[...],
                    preferred_element_type=jnp.float32)
            + b_ref[...]
        )
        h = jnp.maximum(h, 0.0)

    # Final Linear(hidden, 1), no ReLU. Plain [TB, 1] result; avoids any
    # transpose of the full activation.
    q = (
        jnp.dot(h.astype(w_last_ref.dtype), w_last_ref[...],
                preferred_element_type=jnp.float32)
        + b_last_ref[...]
    )
    out_ref[...] = q.astype(out_ref.dtype)


def critic_forward(state, action, params, *, block_batch=512, lane_multiple=128,
                   use_bf16_inputs=False):
    """Pallas-backed Critic forward.

    state:  [B, state_dim] f32
    action: [B, action_dim] f32
    params: list of (W, b) with W: [in, out], b: [1, out] (or [out]); last out == 1
    returns: [B, 1] f32
    """
    B, state_dim = state.shape
    Ba, action_dim = action.shape
    assert B == Ba, (B, Ba)
    n_layers = len(params)
    assert n_layers >= 2, "expect at least one hidden layer (net_dims non-empty)"

    params = [(w, jnp.reshape(b, (1, -1))) for w, b in params]
    dims = [state_dim + action_dim] + [w.shape[1] for w, _ in params]
    assert dims[-1] == 1, dims

    # Zero-pad hidden widths to full lane multiples (exact transformation).
    pdims = [dims[0]] + [_round_up(d, lane_multiple) for d in dims[1:-1]] + [1]

    # Balanced batch tiles: at most 7 padded rows in total.
    num_tiles = max(1, _cdiv(B, block_batch))
    TB = _round_up(_cdiv(B, num_tiles), 8)
    B_pad = num_tiles * TB
    if B_pad != B:
        pad = B_pad - B
        state = jnp.pad(state, ((0, pad), (0, 0)))
        action = jnp.pad(action, ((0, pad), (0, 0)))

    padded_params = []
    for idx, (w, b) in enumerate(params):
        if w.shape[0] != pdims[idx]:
            w = jnp.pad(w, ((0, pdims[idx] - w.shape[0]), (0, 0)))
        if w.shape[1] != pdims[idx + 1]:
            w = jnp.pad(w, ((0, 0), (0, pdims[idx + 1] - w.shape[1])))
            b = jnp.pad(b, ((0, 0), (0, pdims[idx + 1] - b.shape[1])))
        padded_params.append((w, b))

    w_dtype = jnp.bfloat16 if use_bf16_inputs else jnp.float32
    if use_bf16_inputs:
        state = state.astype(jnp.bfloat16)
        action = action.astype(jnp.bfloat16)

    # Split the first-layer weight so the kernel never needs concat([s, a]).
    w0, b0 = padded_params[0]
    w0 = w0.astype(w_dtype)
    w0_s = w0[:state_dim]
    w0_a = w0[state_dim:]
    b0 = b0.astype(jnp.float32)

    mid_params = []
    for w, b in padded_params[1:-1]:
        mid_params.extend([w.astype(w_dtype), b.astype(jnp.float32)])

    w_last, b_last = padded_params[-1]
    w_last = w_last.astype(w_dtype)        # [H_last, 1]
    b_last = b_last.astype(jnp.float32)    # [1, 1]

    operands = [state, action, w0_s, w0_a, b0, *mid_params, w_last, b_last]

    # VMEM budget (worst case: double-buffered weights) -> vmem_limit_bytes.
    weight_bytes = sum(int(a.size) * int(a.dtype.itemsize) for a in operands[2:])
    io_bytes = (2 * TB * (state_dim + action_dim) * int(state.dtype.itemsize)
                + 2 * TB * 4)
    act_bytes = 4 * TB * max(pdims) * 4
    needed = 2 * weight_bytes + io_bytes + act_bytes
    vmem_limit = int(min(max(2 * needed, 32 << 20), 64 << 20))

    flops = 2 * B_pad * sum(pdims[i] * pdims[i + 1] for i in range(len(pdims) - 1))
    bytes_accessed = (
        int(state.size) * int(state.dtype.itemsize)
        + int(action.size) * int(action.dtype.itemsize)
        + weight_bytes
        + B_pad * 4
    )
    cost = pl.CostEstimate(flops=int(flops), transcendentals=0,
                           bytes_accessed=int(bytes_accessed))

    kernel = functools.partial(_critic_kernel, n_layers - 2)
    out_shape = jax.ShapeDtypeStruct((B_pad, 1), jnp.float32)
    out_spec = pl.BlockSpec((TB, 1), lambda i: (i, 0))

    def make_in_specs(weight_buffers):
        def resident(arr):
            # Full-extent block, constant index_map -> stays VMEM-resident.
            if weight_buffers is None:
                return pl.BlockSpec(arr.shape, lambda i: (0, 0))
            return pl.BlockSpec(arr.shape, lambda i: (0, 0),
                                pipeline_mode=pl.Buffered(weight_buffers))
        return [
            pl.BlockSpec((TB, state_dim), lambda i: (i, 0)),
            pl.BlockSpec((TB, action_dim), lambda i: (i, 0)),
        ] + [resident(a) for a in operands[2:]]

    def call(weight_buffers):
        return pl.pallas_call(
            kernel,
            grid=(num_tiles,),
            out_shape=out_shape,
            in_specs=make_in_specs(weight_buffers),
            out_specs=out_spec,
            compiler_params=pltpu.CompilerParams(
                dimension_semantics=("parallel",),
                vmem_limit_bytes=vmem_limit,
            ),
            cost_estimate=cost,
        )(*operands)

    try:
        # Single-buffer the never-changing resident weights (halves their VMEM).
        out = call(1)
    except Exception:
        # Fallback for JAX versions that reject Buffered(1): default buffering.
        out = call(None)

    return out[:B]


def init_critic_params(key, state_dim, action_dim, net_dims):
    """Deterministic synthetic init matching build_mlp([state+action, *net_dims, 1])."""
    dims = [state_dim + action_dim, *net_dims, 1]
    params = []
    for i in range(len(dims) - 1):
        key, kw, kb = jax.random.split(key, 3)
        fan_in = dims[i]
        bound = 1.0 / float(jnp.sqrt(fan_in))
        w = jax.random.uniform(kw, (dims[i], dims[i + 1]), jnp.float32, -bound, bound)
        b = jax.random.uniform(kb, (1, dims[i + 1]), jnp.float32, -bound, bound)
        params.append((w, b))
    return params


def critic_reference(state, action, params):
    """Pure-JAX reference for correctness check."""
    h = jnp.concatenate([state, action], axis=1)
    n = len(params)
    for i, (w, b) in enumerate(params):
        h = h @ w + b
        if i != n - 1:
            h = jnp.maximum(h, 0.0)
    return h


if __name__ == "__main__":
    # Small shapes consistent with the module's forward.
    batch = 8
    state_dim = 16
    action_dim = 8
    net_dims = [32, 32]

    key = jax.random.PRNGKey(0)
    k_state, k_action, k_params = jax.random.split(key, 3)

    state = jax.random.normal(k_state, (batch, state_dim), jnp.float32)
    action = jax.random.normal(k_action, (batch, action_dim), jnp.float32)
    params = init_critic_params(k_params, state_dim, action_dim, net_dims)

    out = jax.block_until_ready(critic_forward(state, action, params))
    ref = critic_reference(state, action, params)
    assert out.shape == (batch, 1), out.shape
    assert jnp.allclose(out, ref, atol=1e-5, rtol=1e-5), (out, ref)

    # Batch not a multiple of 8 exercises the padding path.
    out2 = jax.block_until_ready(critic_forward(state[:6], action[:6], params))
    ref2 = critic_reference(state[:6], action[:6], params)
    assert out2.shape == (6, 1), out2.shape
    assert jnp.allclose(out2, ref2, atol=1e-5, rtol=1e-5), (out2, ref2)

    # Opt-in bf16 inputs/weights (f32 accumulation) -- loose tolerance.
    out3 = jax.block_until_ready(
        critic_forward(state, action, params, use_bf16_inputs=True))
    assert out3.shape == (batch, 1), out3.shape
    assert jnp.allclose(out3, ref, atol=2e-1, rtol=2e-1), (out3, ref)

    print("KERNEL_OK")
</pallas_src>

<mosaic_0001>
module attributes {stable_mosaic.version = 11 : i64} {
  func.func @_critic_kernel(%arg0: i32, %arg1: memref<8x16xf32, #tpu.memory_space<vmem>>, %arg2: memref<8x8xf32, #tpu.memory_space<vmem>>, %arg3: memref<16x128xf32, #tpu.memory_space<vmem>>, %arg4: memref<8x128xf32, #tpu.memory_space<vmem>>, %arg5: memref<1x128xf32, #tpu.memory_space<vmem>>, %arg6: memref<128x128xf32, #tpu.memory_space<vmem>>, %arg7: memref<1x128xf32, #tpu.memory_space<vmem>>, %arg8: memref<128x1xf32, #tpu.memory_space<vmem>>, %arg9: memref<1x1xf32, #tpu.memory_space<vmem>>, %arg10: memref<8x1xf32, #tpu.memory_space<vmem>>) attributes {dimension_semantics = [#tpu.dimension_semantics<parallel>], iteration_bounds = array<i64: 1>, scalar_prefetch = 0 : i64, scratch_operands = 0 : i64, tpu.core_type = #tpu.core_type<tc>, window_params = [{transform_indices = @transform_0, window_bounds = array<i64: 8, 16>}, {transform_indices = @transform_1, window_bounds = array<i64: 8, 8>}, {pipeline_mode = #tpu.pipeline_mode<synchronous>, transform_indices = @transform_2, window_bounds = array<i64: 16, 128>}, {pipeline_mode = #tpu.pipeline_mode<synchronous>, transform_indices = @transform_3, window_bounds = array<i64: 8, 128>}, {pipeline_mode = #tpu.pipeline_mode<synchronous>, transform_indices = @transform_4, window_bounds = array<i64: 1, 128>}, {pipeline_mode = #tpu.pipeline_mode<synchronous>, transform_indices = @transform_5, window_bounds = array<i64: 128, 128>}, {pipeline_mode = #tpu.pipeline_mode<synchronous>, transform_indices = @transform_6, window_bounds = array<i64: 1, 128>}, {pipeline_mode = #tpu.pipeline_mode<synchronous>, transform_indices = @transform_7, window_bounds = array<i64: 128, 1>}, {pipeline_mode = #tpu.pipeline_mode<synchronous>, transform_indices = @transform_8, window_bounds = array<i64: 1, 1>}, {transform_indices = @transform_9, window_bounds = array<i64: 8, 1>}]} {
    %c0 = arith.constant 0 : index
    %c0_0 = arith.constant 0 : index
    %0 = vector.load %arg1[%c0, %c0_0] : memref<8x16xf32, #tpu.memory_space<vmem>>, vector<8x16xf32>
    %c0_1 = arith.constant 0 : index
    %c0_2 = arith.constant 0 : index
    %1 = vector.load %arg3[%c0_1, %c0_2] : memref<16x128xf32, #tpu.memory_space<vmem>>, vector<16x128xf32>
    %cst = arith.constant dense<0.000000e+00> : vector<8x128xf32>
    %2 = tpu.matmul %0, %1, %cst {dimension_numbers = #tpu.dot_dimension_numbers<[1], [0], [0], [1], [0, 0, 1, 1], [], []>} : vector<8x16xf32>, vector<16x128xf32>, vector<8x128xf32> -> vector<8x128xf32>
    %c0_3 = arith.constant 0 : index
    %c0_4 = arith.constant 0 : index
    %3 = vector.load %arg2[%c0_3, %c0_4] : memref<8x8xf32, #tpu.memory_space<vmem>>, vector<8x8xf32>
    %c0_5 = arith.constant 0 : index
    %c0_6 = arith.constant 0 : index
    %4 = vector.load %arg4[%c0_5, %c0_6] : memref<8x128xf32, #tpu.memory_space<vmem>>, vector<8x128xf32>
    %cst_7 = arith.constant dense<0.000000e+00> : vector<8x128xf32>
    %5 = tpu.matmul %3, %4, %cst_7 {dimension_numbers = #tpu.dot_dimension_numbers<[1], [0], [0], [1], [0, 0, 1, 1], [], []>} : vector<8x8xf32>, vector<8x128xf32>, vector<8x128xf32> -> vector<8x128xf32>
    %6 = arith.addf %2, %5 : vector<8x128xf32>
    %c0_8 = arith.constant 0 : index
    %c0_9 = arith.constant 0 : index
    %7 = vector.load %arg5[%c0_8, %c0_9] : memref<1x128xf32, #tpu.memory_space<vmem>>, vector<1x128xf32>
    %8 = vector.broadcast %7 : vector<1x128xf32> to vector<8x128xf32>
    %9 = arith.addf %6, %8 : vector<8x128xf32>
    %cst_10 = arith.constant 0.000000e+00 : f32
    %10 = vector.broadcast %cst_10 : f32 to vector<8x128xf32>
    %11 = arith.maximumf %9, %10 : vector<8x128xf32>
    %c0_11 = arith.constant 0 : index
    %c0_12 = arith.constant 0 : index
    %12 = vector.load %arg6[%c0_11, %c0_12] : memref<128x128xf32, #tpu.memory_space<vmem>>, vector<128x128xf32>
    %cst_13 = arith.constant dense<0.000000e+00> : vector<8x128xf32>
    %13 = tpu.matmul %11, %12, %cst_13 {dimension_numbers = #tpu.dot_dimension_numbers<[1], [0], [0], [1], [0, 0, 1, 1], [], []>} : vector<8x128xf32>, vector<128x128xf32>, vector<8x128xf32> -> vector<8x128xf32>
    %c0_14 = arith.constant 0 : index
    %c0_15 = arith.constant 0 : index
    %14 = vector.load %arg7[%c0_14, %c0_15] : memref<1x128xf32, #tpu.memory_space<vmem>>, vector<1x128xf32>
    %15 = vector.broadcast %14 : vector<1x128xf32> to vector<8x128xf32>
    %16 = arith.addf %13, %15 : vector<8x128xf32>
    %cst_16 = arith.constant 0.000000e+00 : f32
    %17 = vector.broadcast %cst_16 : f32 to vector<8x128xf32>
    %18 = arith.maximumf %16, %17 : vector<8x128xf32>
    %c0_17 = arith.constant 0 : index
    %c0_18 = arith.constant 0 : index
    %19 = vector.load %arg8[%c0_17, %c0_18] : memref<128x1xf32, #tpu.memory_space<vmem>>, vector<128x1xf32>
    %cst_19 = arith.constant dense<0.000000e+00> : vector<8x1xf32>
    %20 = tpu.matmul %18, %19, %cst_19 {dimension_numbers = #tpu.dot_dimension_numbers<[1], [0], [0], [1], [0, 0, 1, 1], [], []>} : vector<8x128xf32>, vector<128x1xf32>, vector<8x1xf32> -> vector<8x1xf32>
    %c0_20 = arith.constant 0 : index
    %c0_21 = arith.constant 0 : index
    %21 = vector.load %arg9[%c0_20, %c0_21] : memref<1x1xf32, #tpu.memory_space<vmem>>, vector<1x1xf32>
    %22 = vector.broadcast %21 : vector<1x1xf32> to vector<8x1xf32>
    %23 = arith.addf %20, %22 : vector<8x1xf32>
    %c0_22 = arith.constant 0 : index
    %c0_23 = arith.constant 0 : index
    %24 = vector.load %arg10[%c0_22, %c0_23] : memref<8x1xf32, #tpu.memory_space<vmem>>, vector<8x1xf32>
    tpu.vector_store %arg10[%c0_22, %c0_23], %23 {strides = array<i32>} : memref<8x1xf32, #tpu.memory_space<vmem>>, vector<8x1xf32>,
    return
  }
  func.func @transform_0(%arg0: i32) -> (i32, i32) {
    %c0_i32 = arith.constant 0 : i32
    %c0_i32_0 = arith.constant 0 : i32
    return %arg0, %c0_i32 : i32, i32
  }
  func.func @transform_1(%arg0: i32) -> (i32, i32) {
    %c0_i32 = arith.constant 0 : i32
    %c0_i32_0 = arith.constant 0 : i32
    return %arg0, %c0_i32 : i32, i32
  }
  func.func @transform_2(%arg0: i32) -> (i32, i32) {
    %c0_i32 = arith.constant 0 : i32
    %c0_i32_0 = arith.constant 0 : i32
    %c0_i32_1 = arith.constant 0 : i32
    return %c0_i32, %c0_i32_0 : i32, i32
  }
  func.func @transform_3(%arg0: i32) -> (i32, i32) {
    %c0_i32 = arith.constant 0 : i32
    %c0_i32_0 = arith.constant 0 : i32
    %c0_i32_1 = arith.constant 0 : i32
    return %c0_i32, %c0_i32_0 : i32, i32
  }
  func.func @transform_4(%arg0: i32) -> (i32, i32) {
    %c0_i32 = arith.constant 0 : i32
    %c0_i32_0 = arith.constant 0 : i32
    %c0_i32_1 = arith.constant 0 : i32
    return %c0_i32, %c0_i32_0 : i32, i32
  }
  func.func @transform_5(%arg0: i32) -> (i32, i32) {
    %c0_i32 = arith.constant 0 : i32
    %c0_i32_0 = arith.constant 0 : i32
    %c0_i32_1 = arith.constant 0 : i32
    return %c0_i32, %c0_i32_0 : i32, i32
  }
  func.func @transform_6(%arg0: i32) -> (i32, i32) {
    %c0_i32 = arith.constant 0 : i32
    %c0_i32_0 = arith.constant 0 : i32
    %c0_i32_1 = arith.constant 0 : i32
    return %c0_i32, %c0_i32_0 : i32, i32
  }
  func.func @transform_7(%arg0: i32) -> (i32, i32) {
    %c0_i32 = arith.constant 0 : i32
    %c0_i32_0 = arith.constant 0 : i32
    %c0_i32_1 = arith.constant 0 : i32
    return %c0_i32, %c0_i32_0 : i32, i32
  }
  func.func @transform_8(%arg0: i32) -> (i32, i32) {
    %c0_i32 = arith.constant 0 : i32
    %c0_i32_0 = arith.constant 0 : i32
    %c0_i32_1 = arith.constant 0 : i32
    return %c0_i32, %c0_i32_0 : i32, i32
  }
  func.func @transform_9(%arg0: i32) -> (i32, i32) {
    %c0_i32 = arith.constant 0 : i32
    %c0_i32_0 = arith.constant 0 : i32
    return %arg0, %c0_i32 : i32, i32
  }
}

module attributes {stable_mosaic.version = 11 : i64} {
  func.func @_critic_kernel(%arg0: i32, %arg1: memref<8x16xf32, #tpu.memory_space<vmem>>, %arg2: memref<8x8xf32, #tpu.memory_space<vmem>>, %arg3: memref<16x128xf32, #tpu.memory_space<vmem>>, %arg4: memref<8x128xf32, #tpu.memory_space<vmem>>, %arg5: memref<1x128xf32, #tpu.memory_space<vmem>>, %arg6: memref<128x128xf32, #tpu.memory_space<vmem>>, %arg7: memref<1x128xf32, #tpu.memory_space<vmem>>, %arg8: memref<128x1xf32, #tpu.memory_space<vmem>>, %arg9: memref<1x1xf32, #tpu.memory_space<vmem>>, %arg10: memref<8x1xf32, #tpu.memory_space<vmem>>) attributes {dimension_semantics = [#tpu.dimension_semantics<parallel>], iteration_bounds = array<i64: 1>, scalar_prefetch = 0 : i64, scratch_operands = 0 : i64, tpu.core_type = #tpu.core_type<tc>, window_params = [{transform_indices = @transform_0, window_bounds = array<i64: 8, 16>}, {transform_indices = @transform_1, window_bounds = array<i64: 8, 8>}, {pipeline_mode = #tpu.pipeline_mode<synchronous>, transform_indices = @transform_2, window_bounds = array<i64: 16, 128>}, {pipeline_mode = #tpu.pipeline_mode<synchronous>, transform_indices = @transform_3, window_bounds = array<i64: 8, 128>}, {pipeline_mode = #tpu.pipeline_mode<synchronous>, transform_indices = @transform_4, window_bounds = array<i64: 1, 128>}, {pipeline_mode = #tpu.pipeline_mode<synchronous>, transform_indices = @transform_5, window_bounds = array<i64: 128, 128>}, {pipeline_mode = #tpu.pipeline_mode<synchronous>, transform_indices = @transform_6, window_bounds = array<i64: 1, 128>}, {pipeline_mode = #tpu.pipeline_mode<synchronous>, transform_indices = @transform_7, window_bounds = array<i64: 128, 1>}, {pipeline_mode = #tpu.pipeline_mode<synchronous>, transform_indices = @transform_8, window_bounds = array<i64: 1, 1>}, {transform_indices = @transform_9, window_bounds = array<i64: 8, 1>}]} {
    %c0 = arith.constant 0 : index
    %c0_0 = arith.constant 0 : index
    %0 = vector.load %arg1[%c0, %c0_0] : memref<8x16xf32, #tpu.memory_space<vmem>>, vector<8x16xf32>
    %c0_1 = arith.constant 0 : index
    %c0_2 = arith.constant 0 : index
    %1 = vector.load %arg3[%c0_1, %c0_2] : memref<16x128xf32, #tpu.memory_space<vmem>>, vector<16x128xf32>
    %cst = arith.constant dense<0.000000e+00> : vector<8x128xf32>
    %2 = tpu.matmul %0, %1, %cst {dimension_numbers = #tpu.dot_dimension_numbers<[1], [0], [0], [1], [0, 0, 1, 1], [], []>} : vector<8x16xf32>, vector<16x128xf32>, vector<8x128xf32> -> vector<8x128xf32>
    %c0_3 = arith.constant 0 : index
    %c0_4 = arith.constant 0 : index
    %3 = vector.load %arg2[%c0_3, %c0_4] : memref<8x8xf32, #tpu.memory_space<vmem>>, vector<8x8xf32>
    %c0_5 = arith.constant 0 : index
    %c0_6 = arith.constant 0 : index
    %4 = vector.load %arg4[%c0_5, %c0_6] : memref<8x128xf32, #tpu.memory_space<vmem>>, vector<8x128xf32>
    %cst_7 = arith.constant dense<0.000000e+00> : vector<8x128xf32>
    %5 = tpu.matmul %3, %4, %cst_7 {dimension_numbers = #tpu.dot_dimension_numbers<[1], [0], [0], [1], [0, 0, 1, 1], [], []>} : vector<8x8xf32>, vector<8x128xf32>, vector<8x128xf32> -> vector<8x128xf32>
    %6 = arith.addf %2, %5 : vector<8x128xf32>
    %c0_8 = arith.constant 0 : index
    %c0_9 = arith.constant 0 : index
    %7 = vector.load %arg5[%c0_8, %c0_9] : memref<1x128xf32, #tpu.memory_space<vmem>>, vector<1x128xf32>
    %8 = vector.broadcast %7 : vector<1x128xf32> to vector<8x128xf32>
    %9 = arith.addf %6, %8 : vector<8x128xf32>
    %cst_10 = arith.constant 0.000000e+00 : f32
    %10 = vector.broadcast %cst_10 : f32 to vector<8x128xf32>
    %11 = arith.maximumf %9, %10 : vector<8x128xf32>
    %c0_11 = arith.constant 0 : index
    %c0_12 = arith.constant 0 : index
    %12 = vector.load %arg6[%c0_11, %c0_12] : memref<128x128xf32, #tpu.memory_space<vmem>>, vector<128x128xf32>
    %cst_13 = arith.constant dense<0.000000e+00> : vector<8x128xf32>
    %13 = tpu.matmul %11, %12, %cst_13 {dimension_numbers = #tpu.dot_dimension_numbers<[1], [0], [0], [1], [0, 0, 1, 1], [], []>} : vector<8x128xf32>, vector<128x128xf32>, vector<8x128xf32> -> vector<8x128xf32>
    %c0_14 = arith.constant 0 : index
    %c0_15 = arith.constant 0 : index
    %14 = vector.load %arg7[%c0_14, %c0_15] : memref<1x128xf32, #tpu.memory_space<vmem>>, vector<1x128xf32>
    %15 = vector.broadcast %14 : vector<1x128xf32> to vector<8x128xf32>
    %16 = arith.addf %13, %15 : vector<8x128xf32>
    %cst_16 = arith.constant 0.000000e+00 : f32
    %17 = vector.broadcast %cst_16 : f32 to vector<8x128xf32>
    %18 = arith.maximumf %16, %17 : vector<8x128xf32>
    %c0_17 = arith.constant 0 : index
    %c0_18 = arith.constant 0 : index
    %19 = vector.load %arg8[%c0_17, %c0_18] : memref<128x1xf32, #tpu.memory_space<vmem>>, vector<128x1xf32>
    %cst_19 = arith.constant dense<0.000000e+00> : vector<8x1xf32>
    %20 = tpu.matmul %18, %19, %cst_19 {dimension_numbers = #tpu.dot_dimension_numbers<[1], [0], [0], [1], [0, 0, 1, 1], [], []>} : vector<8x128xf32>, vector<128x1xf32>, vector<8x1xf32> -> vector<8x1xf32>
    %c0_20 = arith.constant 0 : index
    %c0_21 = arith.constant 0 : index
    %21 = vector.load %arg9[%c0_20, %c0_21] : memref<1x1xf32, #tpu.memory_space<vmem>>, vector<1x1xf32>
    %22 = vector.broadcast %21 : vector<1x1xf32> to vector<8x1xf32>
    %23 = arith.addf %20, %22 : vector<8x1xf32>
    %c0_22 = arith.constant 0 : index
    %c0_23 = arith.constant 0 : index
    %24 = vector.load %arg10[%c0_22, %c0_23] : memref<8x1xf32, #tpu.memory_space<vmem>>, vector<8x1xf32>
    tpu.vector_store %arg10[%c0_22, %c0_23], %23 {strides = array<i32>} : memref<8x1xf32, #tpu.memory_space<vmem>>, vector<8x1xf32>,
    return
  }
  func.func @transform_0(%arg0: i32) -> (i32, i32) {
    %c0_i32 = arith.constant 0 : i32
    %c0_i32_0 = arith.constant 0 : i32
    return %arg0, %c0_i32 : i32, i32
  }
  func.func @transform_1(%arg0: i32) -> (i32, i32) {
    %c0_i32 = arith.constant 0 : i32
    %c0_i32_0 = arith.constant 0 : i32
    return %arg0, %c0_i32 : i32, i32
  }
  func.func @transform_2(%arg0: i32) -> (i32, i32) {
    %c0_i32 = arith.constant 0 : i32
    %c0_i32_0 = arith.constant 0 : i32
    %c0_i32_1 = arith.constant 0 : i32
    return %c0_i32, %c0_i32_0 : i32, i32
  }
  func.func @transform_3(%arg0: i32) -> (i32, i32) {
    %c0_i32 = arith.constant 0 : i32
    %c0_i32_0 = arith.constant 0 : i32
    %c0_i32_1 = arith.constant 0 : i32
    return %c0_i32, %c0_i32_0 : i32, i32
  }
  func.func @transform_4(%arg0: i32) -> (i32, i32) {
    %c0_i32 = arith.constant 0 : i32
    %c0_i32_0 = arith.constant 0 : i32
    %c0_i32_1 = arith.constant 0 : i32
    return %c0_i32, %c0_i32_0 : i32, i32
  }
  func.func @transform_5(%arg0: i32) -> (i32, i32) {
    %c0_i32 = arith.constant 0 : i32
    %c0_i32_0 = arith.constant 0 : i32
    %c0_i32_1 = arith.constant 0 : i32
    return %c0_i32, %c0_i32_0 : i32, i32
  }
  func.func @transform_6(%arg0: i32) -> (i32, i32) {
    %c0_i32 = arith.constant 0 : i32
    %c0_i32_0 = arith.constant 0 : i32
    %c0_i32_1 = arith.constant 0 : i32
    return %c0_i32, %c0_i32_0 : i32, i32
  }
  func.func @transform_7(%arg0: i32) -> (i32, i32) {
    %c0_i32 = arith.constant 0 : i32
    %c0_i32_0 = arith.constant 0 : i32
    %c0_i32_1 = arith.constant 0 : i32
    return %c0_i32, %c0_i32_0 : i32, i32
  }
  func.func @transform_8(%arg0: i32) -> (i32, i32) {
    %c0_i32 = arith.constant 0 : i32
    %c0_i32_0 = arith.constant 0 : i32
    %c0_i32_1 = arith.constant 0 : i32
    return %c0_i32, %c0_i32_0 : i32, i32
  }
  func.func @transform_9(%arg0: i32) -> (i32, i32) {
    %c0_i32 = arith.constant 0 : i32
    %c0_i32_0 = arith.constant 0 : i32
    return %arg0, %c0_i32 : i32, i32
  }
}

</mosaic_0001>

<llo_original>
// kernel: tpu_custom_call.1
$region0: #{tpu_custom_call.1}
  #allocation0 [shape = 'u32[]', space=smem, size = 0x4, offset = 0x4, fixed_abs, tag = 'smem constant byte address 0x4 - core index']
  #allocation1 [shape = 'u32[144,128]{1,0:T(1,128)}', space=vmem, size = 0x12000, scoped, tag = 'internal scratch']
  #allocation2 [shape = 'f32[1,1]{1,0:T(1,128)S(1)}', space=vmem, size = 0x200, scoped, tag = 'scoped memory for tpu_custom_call.1']
  %s0 = inlined_call_operand.hbm [shape: f32[8,16], index: 0, kind: input, shape index: {}]
  %s1 = inlined_call_operand.hbm [shape: f32[8,8], index: 1, kind: input, shape index: {}]
  %s2 = inlined_call_operand.vmem [shape: f32[16,128], index: 2, kind: input, shape index: {}]
  %s3 = inlined_call_operand.hbm [shape: f32[8,128], index: 3, kind: input, shape index: {}]
  %s4 = inlined_call_operand.vmem [shape: f32[1,128], index: 4, kind: input, shape index: {}]
  %s5 = inlined_call_operand.vmem [shape: f32[128,128], index: 5, kind: input, shape index: {}]
  %s6 = inlined_call_operand.vmem [shape: f32[1,128], index: 6, kind: input, shape index: {}]
  %s7 = inlined_call_operand.vmem [shape: f32[128,1], index: 7, kind: input, shape index: {}]
  %s8 = inlined_call_operand.<no memory space> [shape: f32[1,1], index: 8, kind: input, shape index: {}]
  %s9 = inlined_call_operand.vmem [shape: f32[8,1], index: 9, kind: output, shape index: {}]
  %s10 = sld [smem:[#allocation0]]
  $region58: #{tpu_custom_call.1} parent=0
    _
  %s12 = ssub.s32 1, %s10
  %s13 = scalar_select 0, %s12, %s10
  %v14 = vstv %s8
  %15 = vst [vmem:[#allocation2] sm:$0x1] %v14
  $region1: #{tpu_custom_call.1} parent=0
    #allocation3 [shape = 'u8[4096]{0}', space=vmem, size = 0x1000, scoped, tag = 'input window, operand 0, single buffered']
    #allocation4 [shape = 's32[1]{0}', space=sflag, size = 0x4, scoped, tag = 'scoped memory for tpu_custom_call.1']
    #allocation5 [shape = 'u8[4096]{0}', space=vmem, size = 0x1000, scoped, tag = 'input window, operand 1, single buffered']
    #allocation6 [shape = 's32[1]{0}', space=sflag, size = 0x4, scoped, tag = 'scoped memory for tpu_custom_call.1']
    #allocation7 [shape = 'u8[4096]{0}', space=vmem, size = 0x1000, scoped, tag = 'input window, operand 3, single buffered']
    %16 = vsyncpa [#allocation4], 0
    %17 = vsyncpa [#allocation6], 0
    // Predicated region
    $region2: #{tpu_custom_call.1} parent=1 // pred_check
      _
    $region3: #{tpu_custom_call.1} parent=1 // pred_check_branch
      %19 = sbr.rel (0) target = $region5
    $region4: #{tpu_custom_call.1} parent=1 // pred_region
      %s21 = ssub.s32 128, 128
      %22 = vsyncadd [#allocation4], %s21
      %s24 = sshll.u32 [#allocation3], 4
      %s25 = int_to_ptr.vmem [resolvable:$true] %s24
      %27 = dma.hbm_to_vmem [thread:$0]  %s0, 128, %s25, [#allocation4]
    $region5: #{tpu_custom_call.1} parent=1 // pred_fallthru
      _
    // Predicated region
    $region6: #{tpu_custom_call.1} parent=1 // pred_check
      _
    $region7: #{tpu_custom_call.1} parent=1 // pred_check_branch
      %29 = sbr.rel (0) target = $region9
    $region8: #{tpu_custom_call.1} parent=1 // pred_region
      %s31 = ssub.s32 128, 128
      %32 = vsyncadd [#allocation6], %s31
      %s34 = sshll.u32 [#allocation5], 4
      %s35 = int_to_ptr.vmem [resolvable:$true] %s34
      %37 = dma.hbm_to_vmem [thread:$0]  %s1, 128, %s35, [#allocation6]
    $region9: #{tpu_custom_call.1} parent=1 // pred_fallthru
      _
    // Predicated region
    $region10: #{tpu_custom_call.1} parent=1 // pred_check
      _
    $region11: #{tpu_custom_call.1} parent=1 // pred_check_branch
      %39 = sbr.rel (0) target = $region13
    $region12: #{tpu_custom_call.1} parent=1 // pred_region
      _
    $region13: #{tpu_custom_call.1} parent=1 // pred_fallthru
      _
    // Predicated region
    $region14: #{tpu_custom_call.1} parent=1 // pred_check
      _
    $region15: #{tpu_custom_call.1} parent=1 // pred_check_branch
      %41 = sbr.rel (0) target = $region17
    $region16: #{tpu_custom_call.1} parent=1 // pred_region
      %s43 = ssub.s32 128, 128
      %44 = vsyncadd [#allocation6], %s43
      %s46 = sshll.u32 [#allocation7], 4
      %s47 = int_to_ptr.vmem [resolvable:$true] %s46
      %49 = dma.hbm_to_vmem [thread:$0]  %s3, 128, %s47, [#allocation6]
    $region17: #{tpu_custom_call.1} parent=1 // pred_fallthru
      _
    // Predicated region
    $region18: #{tpu_custom_call.1} parent=1 // pred_check
      _
    $region19: #{tpu_custom_call.1} parent=1 // pred_check_branch
      %51 = sbr.rel (0) target = $region21
    $region20: #{tpu_custom_call.1} parent=1 // pred_region
      _
    $region21: #{tpu_custom_call.1} parent=1 // pred_fallthru
      _
    // Predicated region
    $region22: #{tpu_custom_call.1} parent=1 // pred_check
      _
    $region23: #{tpu_custom_call.1} parent=1 // pred_check_branch
      %53 = sbr.rel (0) target = $region25
    $region24: #{tpu_custom_call.1} parent=1 // pred_region
      _
    $region25: #{tpu_custom_call.1} parent=1 // pred_fallthru
      _
    // Predicated region
    $region26: #{tpu_custom_call.1} parent=1 // pred_check
      _
    $region27: #{tpu_custom_call.1} parent=1 // pred_check_branch
      %55 = sbr.rel (0) target = $region29
    $region28: #{tpu_custom_call.1} parent=1 // pred_region
      _
    $region29: #{tpu_custom_call.1} parent=1 // pred_fallthru
      _
    // Predicated region
    $region30: #{tpu_custom_call.1} parent=1 // pred_check
      _
    $region31: #{tpu_custom_call.1} parent=1 // pred_check_branch
      %57 = sbr.rel (0) target = $region33
    $region32: #{tpu_custom_call.1} parent=1 // pred_region
      _
    $region33: #{tpu_custom_call.1} parent=1 // pred_fallthru
      _
    // Predicated region
    $region34: #{tpu_custom_call.1} parent=1 // pred_check
      _
    $region35: #{tpu_custom_call.1} parent=1 // pred_check_branch
      %59 = sbr.rel (0) target = $region37
    $region36: #{tpu_custom_call.1} parent=1 // pred_region
      _
    $region37: #{tpu_custom_call.1} parent=1 // pred_fallthru
      _
    // Predicated region
    $region38: #{tpu_custom_call.1} parent=1 // pred_check
      _
    $region39: #{tpu_custom_call.1} parent=1 // pred_check_branch
      %61 = sbr.rel (0) target = $region41
    $region40: #{tpu_custom_call.1} parent=1 // pred_region
      %62 = dma.done [#allocation4], 128
    $region41: #{tpu_custom_call.1} parent=1 // pred_fallthru
      _
    // Predicated region
    $region42: #{tpu_custom_call.1} parent=1 // pred_check
      _
    $region43: #{tpu_custom_call.1} parent=1 // pred_check_branch
      %64 = sbr.rel (0) target = $region45
    $region44: #{tpu_custom_call.1} parent=1 // pred_region
      %65 = dma.done [#allocation6], 128
    $region45: #{tpu_custom_call.1} parent=1 // pred_fallthru
      _
    // Predicated region
    $region46: #{tpu_custom_call.1} parent=1 // pred_check
      _
    $region47: #{tpu_custom_call.1} parent=1 // pred_check_branch
      %67 = sbr.rel (0) target = $region49
    $region48: #{tpu_custom_call.1} parent=1 // pred_region
      %68 = dma.done [#allocation6], 128
    $region49: #{tpu_custom_call.1} parent=1 // pred_fallthru
      _
    %v69 = vld [vmem:[#allocation3] sm:$0xff]
    %v70 = vld [vmem:[%s2] sm:$0xff]
    %v71 = vld [vmem:[%s2 + $0x8] sm:$0xff]
    %v72 = vld [vmem:[#allocation5] sm:$0xff]
    %v73 = vld [vmem:[#allocation7] sm:$0xff]
    %vm74 = vcmask 64512
    %v76 = vsel %vm74, %v72, 0
    %78 = vmatprep.subr.mxu0 0.0
    %79 = vmatpush1.msra.mxu0 %v73
    %80 = vmatprep.subr.mxu0 0.0
    %81 = vmatpush1.msra.mxu0 0.0
    %82 = vmatprep.subr.mxu0 0.0
    %83 = vmatpush1.msra.mxu0 0.0
    %84 = vmatprep.subr.mxu0 0.0
    %85 = vmatpush1.msra.mxu0 0.0
    %86 = vmatprep.subr.mxu0 0.0
    %87 = vmatpush1.msra.mxu0 0.0
    %88 = vmatprep.subr.mxu0 0.0
    %89 = vmatpush1.msra.mxu0 0.0
    %90 = vmatprep.subr.mxu0 0.0
    %91 = vmatpush1.msra.mxu0 0.0
    %92 = vmatprep.subr.mxu0 0.0
    %93 = vmatpush1.msra.mxu0 0.0
    %94 = vmatprep.subr.mxu0 0.0
    %95 = vmatpush1.msra.mxu0 0.0
    %96 = vmatprep.subr.mxu0 0.0
    %97 = vmatpush1.msra.mxu0 0.0
    %98 = vmatprep.subr.mxu0 0.0
    %99 = vmatpush1.msra.mxu0 0.0
    %100 = vmatprep.subr.mxu0 0.0
    %101 = vmatpush1.msra.mxu0 0.0
    %102 = vmatprep.subr.mxu0 0.0
    %103 = vmatpush1.msra.mxu0 0.0
    %104 = vmatprep.subr.mxu0 0.0
    %105 = vmatpush1.msra.mxu0 0.0
    %106 = vmatprep.subr.mxu0 0.0
    %107 = vmatpush1.msra.mxu0 0.0
    %108 = vmatprep.subr.mxu0 0.0
    %109 = vmatpush1.msra.mxu0 0.0
    %110 = vmatprep.subr.mxu0 0.0
    %111 = vmatpush1.msra.mxu0 0.0
    %112 = vmatprep.subr.mxu0 0.0
    %113 = vmatpush1.msra.mxu0 0.0
    %114 = vmatprep.subr.mxu0 0.0
    %115 = vmatpush1.msra.mxu0 0.0
    %116 = vmatprep.subr.mxu0 0.0
    %117 = vmatpush1.msra.mxu0 0.0
    %118 = vmatprep.subr.mxu0 0.0
    %119 = vmatpush1.msra.mxu0 0.0
    %120 = vmatprep.subr.mxu0 0.0
    %121 = vmatpush1.msra.mxu0 0.0
    %122 = vmatprep.subr.mxu0 0.0
    %123 = vmatpush1.msra.mxu0 0.0
    %124 = vmatprep.subr.mxu0 0.0
    %125 = vmatpush1.msra.mxu0 0.0
    %126 = vmatprep.subr.mxu0 0.0
    %127 = vmatpush1.msra.mxu0 0.0
    %128 = vmatprep.subr.mxu0 0.0
    %129 = vmatpush1.msra.mxu0 0.0
    %130 = vmatprep.subr.mxu0 0.0
    %131 = vmatpush1.msra.mxu0 0.0
    %132 = vmatprep.subr.mxu0 0.0
    %133 = vmatpush1.msra.mxu0 0.0
    %134 = vmatprep.subr.mxu0 0.0
    %135 = vmatpush1.msra.mxu0 0.0
    %136 = vmatprep.subr.mxu0 0.0
    %137 = vmatpush1.msra.mxu0 0.0
    %138 = vmatprep.subr.mxu0 0.0
    %139 = vmatpush1.msra.mxu0 0.0
    %140 = vmatprep.subr.mxu0 0.0
    %141 = vmatpush1.msra.mxu0 0.0
    %142 = vmatprep.mubr.f32.mxu0 0.0
    %143 = vmatmul.mubr.f32.gmra.mrb[0].mxu0 %v76
    %v144 = vpop.f32.mrb[0].mxu0
    %v145 = vadd.f32 0.0, %v144
    %v146 = vpop.f32.mrb[0].mxu0
    %147 = vdwg.mxu0
    %vm148 = vcmask 130048
    %v150 = vsel %vm148, %v69, 0
    %152 = vmatprep.subr.mxu0 0.0
    %153 = vmatpush1.msra.mxu0 %v70
    %154 = vmatprep.subr.mxu0 0.0
    %155 = vmatpush1.msra.mxu0 %v71
    %156 = vmatprep.subr.mxu0 0.0
    %157 = vmatpush1.msra.mxu0 0.0
    %158 = vmatprep.subr.mxu0 0.0
    %159 = vmatpush1.msra.mxu0 0.0
    %160 = vmatprep.subr.mxu0 0.0
    %161 = vmatpush1.msra.mxu0 0.0
    %162 = vmatprep.subr.mxu0 0.0
    %163 = vmatpush1.msra.mxu0 0.0
    %164 = vmatprep.subr.mxu0 0.0
    %165 = vmatpush1.msra.mxu0 0.0
    %166 = vmatprep.subr.mxu0 0.0
    %167 = vmatpush1.msra.mxu0 0.0
    %168 = vmatprep.subr.mxu0 0.0
    %169 = vmatpush1.msra.mxu0 0.0
    %170 = vmatprep.subr.mxu0 0.0
    %171 = vmatpush1.msra.mxu0 0.0
    %172 = vmatprep.subr.mxu0 0.0
    %173 = vmatpush1.msra.mxu0 0.0
    %174 = vmatprep.subr.mxu0 0.0
    %175 = vmatpush1.msra.mxu0 0.0
    %176 = vmatprep.subr.mxu0 0.0
    %177 = vmatpush1.msra.mxu0 0.0
    %178 = vmatprep.subr.mxu0 0.0
    %179 = vmatpush1.msra.mxu0 0.0
    %180 = vmatprep.subr.mxu0 0.0
    %181 = vmatpush1.msra.mxu0 0.0
    %182 = vmatprep.subr.mxu0 0.0
    %183 = vmatpush1.msra.mxu0 0.0
    %184 = vmatprep.subr.mxu0 0.0
    %185 = vmatpush1.msra.mxu0 0.0
    %186 = vmatprep.subr.mxu0 0.0
    %187 = vmatpush1.msra.mxu0 0.0
    %188 = vmatprep.subr.mxu0 0.0
    %189 = vmatpush1.msra.mxu0 0.0
    %190 = vmatprep.subr.mxu0 0.0
    %191 = vmatpush1.msra.mxu0 0.0
    %192 = vmatprep.subr.mxu0 0.0
    %193 = vmatpush1.msra.mxu0 0.0
    %194 = vmatprep.subr.mxu0 0.0
    %195 = vmatpush1.msra.mxu0 0.0
    %196 = vmatprep.subr.mxu0 0.0
    %197 = vmatpush1.msra.mxu0 0.0
    %198 = vmatprep.subr.mxu0 0.0
    %199 = vmatpush1.msra.mxu0 0.0
    %200 = vmatprep.subr.mxu0 0.0
    %201 = vmatpush1.msra.mxu0 0.0
    %202 = vmatprep.subr.mxu0 0.0
    %203 = vmatpush1.msra.mxu0 0.0
    %204 = vmatprep.subr.mxu0 0.0
    %205 = vmatpush1.msra.mxu0 0.0
    %206 = vmatprep.subr.mxu0 0.0
    %207 = vmatpush1.msra.mxu0 0.0
    %208 = vmatprep.subr.mxu0 0.0
    %209 = vmatpush1.msra.mxu0 0.0
    %210 = vmatprep.subr.mxu0 0.0
    %211 = vmatpush1.msra.mxu0 0.0
    %212 = vmatprep.subr.mxu0 0.0
    %213 = vmatpush1.msra.mxu0 0.0
    %214 = vmatprep.subr.mxu0 0.0
    %215 = vmatpush1.msra.mxu0 0.0
    %216 = vmatprep.mubr.f32.mxu0 0.0
    %217 = vmatmul.mubr.f32.gmra.mrb[0].mxu0 %v150
    %v218 = vpop.f32.mrb[0].mxu0
    %v219 = vadd.f32 %v145, %v218
    %v220 = vpop.f32.mrb[0].mxu0
    %221 = vdwg.mxu0
    %v222 = vld [vmem:[%s4] sm:$0x1]
    %v224 = vlaneseq
    %v225 = vshrl.u32 %v224, 7
    %v226 = vsub.s32 0, %v225
    %v227 = vrot.slane %v222, %v226
    %v229 = vadd.f32 %v219, %v227
    %v230 = vmax.f32 %v229, 0.0
    %v231 = vld [vmem:[%s5] sm:$0xff]
    %v232 = vld [vmem:[%s5 + $0x8] sm:$0xff]
    %v233 = vld [vmem:[%s5 + $0x10] sm:$0xff]
    %v234 = vld [vmem:[%s5 + $0x18] sm:$0xff]
    %v235 = vld [vmem:[%s5 + $0x20] sm:$0xff]
    %v236 = vld [vmem:[%s5 + $0x28] sm:$0xff]
    %v237 = vld [vmem:[%s5 + $0x30] sm:$0xff]
    %v238 = vld [vmem:[%s5 + $0x38] sm:$0xff]
    %v239 = vld [vmem:[%s5 + $0x40] sm:$0xff]
    %v240 = vld [vmem:[%s5 + $0x48] sm:$0xff]
    %v241 = vld [vmem:[%s5 + $0x50] sm:$0xff]
    %v242 = vld [vmem:[%s5 + $0x58] sm:$0xff]
    %v243 = vld [vmem:[%s5 + $0x60] sm:$0xff]
    %v244 = vld [vmem:[%s5 + $0x68] sm:$0xff]
    %v245 = vld [vmem:[%s5 + $0x70] sm:$0xff]
    %v246 = vld [vmem:[%s5 + $0x78] sm:$0xff]
    %v247 = vld [vmem:[%s6] sm:$0x1]
    %v249 = vlaneseq
    %v250 = vshrl.u32 %v249, 7
    %v251 = vsub.s32 0, %v250
    %v252 = vrot.slane %v247, %v251
    %254 = vmatprep.subr.mxu0 0.0
    %255 = vmatpush1.msra.mxu0 %v231
    %256 = vmatprep.subr.mxu0 0.0
    %257 = vmatpush1.msra.mxu0 %v232
    %258 = vmatprep.subr.mxu0 0.0
    %259 = vmatpush1.msra.mxu0 %v233
    %260 = vmatprep.subr.mxu0 0.0
    %261 = vmatpush1.msra.mxu0 %v234
    %262 = vmatprep.subr.mxu0 0.0
    %263 = vmatpush1.msra.mxu0 %v235
    %264 = vmatprep.subr.mxu0 0.0
    %265 = vmatpush1.msra.mxu0 %v236
    %266 = vmatprep.subr.mxu0 0.0
    %267 = vmatpush1.msra.mxu0 %v237
    %268 = vmatprep.subr.mxu0 0.0
    %269 = vmatpush1.msra.mxu0 %v238
    %270 = vmatprep.subr.mxu0 0.0
    %271 = vmatpush1.msra.mxu0 %v239
    %272 = vmatprep.subr.mxu0 0.0
    %273 = vmatpush1.msra.mxu0 %v240
    %274 = vmatprep.subr.mxu0 0.0
    %275 = vmatpush1.msra.mxu0 %v241
    %276 = vmatprep.subr.mxu0 0.0
    %277 = vmatpush1.msra.mxu0 %v242
    %278 = vmatprep.subr.mxu0 0.0
    %279 = vmatpush1.msra.mxu0 %v243
    %280 = vmatprep.subr.mxu0 0.0
    %281 = vmatpush1.msra.mxu0 %v244
    %282 = vmatprep.subr.mxu0 0.0
    %283 = vmatpush1.msra.mxu0 %v245
    %284 = vmatprep.subr.mxu0 0.0
    %285 = vmatpush1.msra.mxu0 %v246
    %286 = vmatprep.subr.mxu0 0.0
    %287 = vmatpush1.msra.mxu0 0.0
    %288 = vmatprep.subr.mxu0 0.0
    %289 = vmatpush1.msra.mxu0 0.0
    %290 = vmatprep.subr.mxu0 0.0
    %291 = vmatpush1.msra.mxu0 0.0
    %292 = vmatprep.subr.mxu0 0.0
    %293 = vmatpush1.msra.mxu0 0.0
    %294 = vmatprep.subr.mxu0 0.0
    %295 = vmatpush1.msra.mxu0 0.0
    %296 = vmatprep.subr.mxu0 0.0
    %297 = vmatpush1.msra.mxu0 0.0
    %298 = vmatprep.subr.mxu0 0.0
    %299 = vmatpush1.msra.mxu0 0.0
    %300 = vmatprep.subr.mxu0 0.0
    %301 = vmatpush1.msra.mxu0 0.0
    %302 = vmatprep.subr.mxu0 0.0
    %303 = vmatpush1.msra.mxu0 0.0
    %304 = vmatprep.subr.mxu0 0.0
    %305 = vmatpush1.msra.mxu0 0.0
    %306 = vmatprep.subr.mxu0 0.0
    %307 = vmatpush1.msra.mxu0 0.0
    %308 = vmatprep.subr.mxu0 0.0
    %309 = vmatpush1.msra.mxu0 0.0
    %310 = vmatprep.subr.mxu0 0.0
    %311 = vmatpush1.msra.mxu0 0.0
    %312 = vmatprep.subr.mxu0 0.0
    %313 = vmatpush1.msra.mxu0 0.0
    %314 = vmatprep.subr.mxu0 0.0
    %315 = vmatpush1.msra.mxu0 0.0
    %316 = vmatprep.subr.mxu0 0.0
    %317 = vmatpush1.msra.mxu0 0.0
    %318 = vmatprep.mubr.f32.mxu0 0.0
    %319 = vmatmul.mubr.f32.gmra.mrb[0].mxu0 %v230
    %v320 = vpop.f32.mrb[0].mxu0
    %v321 = vadd.f32 %v252, %v320
    %v322 = vpop.f32.mrb[0].mxu0
    %323 = vdwg.mxu0
    %v324 = vmax.f32 %v321, 0.0
    %v325 = vld [vmem:[%s7] sm:$0xff]
    %v326 = vld [vmem:[%s7 + $0x8] sm:$0xff]
    %v327 = vld [vmem:[%s7 + $0x10] sm:$0xff]
    %v328 = vld [vmem:[%s7 + $0x18] sm:$0xff]
    %v329 = vld [vmem:[%s7 + $0x20] sm:$0xff]
    %v330 = vld [vmem:[%s7 + $0x28] sm:$0xff]
    %v331 = vld [vmem:[%s7 + $0x30] sm:$0xff]
    %v332 = vld [vmem:[%s7 + $0x38] sm:$0xff]
    %v333 = vld [vmem:[%s7 + $0x40] sm:$0xff]
    %v334 = vld [vmem:[%s7 + $0x48] sm:$0xff]
    %v335 = vld [vmem:[%s7 + $0x50] sm:$0xff]
    %v336 = vld [vmem:[%s7 + $0x58] sm:$0xff]
    %v337 = vld [vmem:[%s7 + $0x60] sm:$0xff]
    %v338 = vld [vmem:[%s7 + $0x68] sm:$0xff]
    %v339 = vld [vmem:[%s7 + $0x70] sm:$0xff]
    %v340 = vld [vmem:[%s7 + $0x78] sm:$0xff]
    %v341 = vld [vmem:[#allocation2] sm:$0x1]
    %v343 = vlaneseq
    %v344 = vshrl.u32 %v343, 7
    %v345 = vsub.s32 0, %v344
    %v346 = vrot.slane %v341, %v345
    %348 = vmatprep.subr.mxu0 0.0
    %349 = vmatpush1.msra.mxu0 %v325
    %350 = vmatprep.subr.mxu0 0.0
    %351 = vmatpush1.msra.mxu0 %v326
    %352 = vmatprep.subr.mxu0 0.0
    %353 = vmatpush1.msra.mxu0 %v327
    %354 = vmatprep.subr.mxu0 0.0
    %355 = vmatpush1.msra.mxu0 %v328
    %356 = vmatprep.subr.mxu0 0.0
    %357 = vmatpush1.msra.mxu0 %v329
    %358 = vmatprep.subr.mxu0 0.0
    %359 = vmatpush1.msra.mxu0 %v330
    %360 = vmatprep.subr.mxu0 0.0
    %361 = vmatpush1.msra.mxu0 %v331
    %362 = vmatprep.subr.mxu0 0.0
    %363 = vmatpush1.msra.mxu0 %v332
    %364 = vmatprep.subr.mxu0 0.0
    %365 = vmatpush1.msra.mxu0 %v333
    %366 = vmatprep.subr.mxu0 0.0
    %367 = vmatpush1.msra.mxu0 %v334
    %368 = vmatprep.subr.mxu0 0.0
    %369 = vmatpush1.msra.mxu0 %v335
    %370 = vmatprep.subr.mxu0 0.0
    %371 = vmatpush1.msra.mxu0 %v336
    %372 = vmatprep.subr.mxu0 0.0
    %373 = vmatpush1.msra.mxu0 %v337
    %374 = vmatprep.subr.mxu0 0.0
    %375 = vmatpush1.msra.mxu0 %v338
    %376 = vmatprep.subr.mxu0 0.0
    %377 = vmatpush1.msra.mxu0 %v339
    %378 = vmatprep.subr.mxu0 0.0
    %379 = vmatpush1.msra.mxu0 %v340
    %380 = vmatprep.subr.mxu0 0.0
    %381 = vmatpush1.msra.mxu0 0.0
    %382 = vmatprep.subr.mxu0 0.0
    %383 = vmatpush1.msra.mxu0 0.0
    %384 = vmatprep.subr.mxu0 0.0
    %385 = vmatpush1.msra.mxu0 0.0
    %386 = vmatprep.subr.mxu0 0.0
    %387 = vmatpush1.msra.mxu0 0.0
    %388 = vmatprep.subr.mxu0 0.0
    %389 = vmatpush1.msra.mxu0 0.0
    %390 = vmatprep.subr.mxu0 0.0
    %391 = vmatpush1.msra.mxu0 0.0
    %392 = vmatprep.subr.mxu0 0.0
    %393 = vmatpush1.msra.mxu0 0.0
    %394 = vmatprep.subr.mxu0 0.0
    %395 = vmatpush1.msra.mxu0 0.0
    %396 = vmatprep.subr.mxu0 0.0
    %397 = vmatpush1.msra.mxu0 0.0
    %398 = vmatprep.subr.mxu0 0.0
    %399 = vmatpush1.msra.mxu0 0.0
    %400 = vmatprep.subr.mxu0 0.0
    %401 = vmatpush1.msra.mxu0 0.0
    %402 = vmatprep.subr.mxu0 0.0
    %403 = vmatpush1.msra.mxu0 0.0
    %404 = vmatprep.subr.mxu0 0.0
    %405 = vmatpush1.msra.mxu0 0.0
    %406 = vmatprep.subr.mxu0 0.0
    %407 = vmatpush1.msra.mxu0 0.0
    %408 = vmatprep.subr.mxu0 0.0
    %409 = vmatpush1.msra.mxu0 0.0
    %410 = vmatprep.subr.mxu0 0.0
    %411 = vmatpush1.msra.mxu0 0.0
    %412 = vmatprep.mubr.f32.mxu0 0.0
    %413 = vmatmul.mubr.f32.gmra.mrb[0].mxu0 %v324
    %v414 = vpop.f32.mrb[0].mxu0
    %v415 = vadd.f32 %v346, %v414
    %v416 = vpop.f32.mrb[0].mxu0
    %417 = vdwg.mxu0
    %vm418 = vcmask 7168
    %419 = vst.msk [vmem:[%s9] sm:$0xff] %vm418, %v415
    // Predicated region
    $region50: #{tpu_custom_call.1} parent=1 // pred_check
      _
    $region51: #{tpu_custom_call.1} parent=1 // pred_check_branch
      %421 = sbr.rel (0) target = $region53
    $region52: #{tpu_custom_call.1} parent=1 // pred_region
      _
    $region53: #{tpu_custom_call.1} parent=1 // pred_fallthru
      _
    // Predicated region
    $region54: #{tpu_custom_call.1} parent=1 // pred_check
      _
    $region55: #{tpu_custom_call.1} parent=1 // pred_check_branch
      %423 = sbr.rel (0) target = $region57
    $region56: #{tpu_custom_call.1} parent=1 // pred_region
      _
    $region57: #{tpu_custom_call.1} parent=1 // pred_fallthru
      _
    %424 = vsyncpa [#allocation4], 1
    %425 = vsyncpa [#allocation6], 1

// kernel: tpu_custom_call.1
$region0: #{tpu_custom_call.1}
  #allocation0 [shape = 'u32[]', space=smem, size = 0x4, offset = 0x4, fixed_abs, tag = 'smem constant byte address 0x4 - core index']
  #allocation1 [shape = 'u32[144,128]{1,0:T(1,128)}', space=vmem, size = 0x12000, scoped, tag = 'internal scratch']
  #allocation2 [shape = 'f32[1,1]{1,0:T(1,128)S(1)}', space=vmem, size = 0x200, scoped, tag = 'scoped memory for tpu_custom_call.1']
  %s0 = inlined_call_operand.hbm [shape: f32[8,16], index: 0, kind: input, shape index: {}]
  %s1 = inlined_call_operand.hbm [shape: f32[8,8], index: 1, kind: input, shape index: {}]
  %s2 = inlined_call_operand.vmem [shape: f32[16,128], index: 2, kind: input, shape index: {}]
  %s3 = inlined_call_operand.hbm [shape: f32[8,128], index: 3, kind: input, shape index: {}]
  %s4 = inlined_call_operand.vmem [shape: f32[1,128], index: 4, kind: input, shape index: {}]
  %s5 = inlined_call_operand.vmem [shape: f32[128,128], index: 5, kind: input, shape index: {}]
  %s6 = inlined_call_operand.vmem [shape: f32[1,128], index: 6, kind: input, shape index: {}]
  %s7 = inlined_call_operand.vmem [shape: f32[128,1], index: 7, kind: input, shape index: {}]
  %s8 = inlined_call_operand.<no memory space> [shape: f32[1,1], index: 8, kind: input, shape index: {}]
  %s9 = inlined_call_operand.vmem [shape: f32[8,1], index: 9, kind: output, shape index: {}]
  %s10 = sld [smem:[#allocation0]]
  $region58: #{tpu_custom_call.1} parent=0
    _
  %s12 = ssub.s32 1, %s10
  %s13 = scalar_select 0, %s12, %s10
  %v14 = vstv %s8
  %15 = vst [vmem:[#allocation2] sm:$0x1] %v14
  $region1: #{tpu_custom_call.1} parent=0
    #allocation3 [shape = 'u8[4096]{0}', space=vmem, size = 0x1000, scoped, tag = 'input window, operand 0, single buffered']
    #allocation4 [shape = 's32[1]{0}', space=sflag, size = 0x4, scoped, tag = 'scoped memory for tpu_custom_call.1']
    #allocation5 [shape = 'u8[4096]{0}', space=vmem, size = 0x1000, scoped, tag = 'input window, operand 1, single buffered']
    #allocation6 [shape = 's32[1]{0}', space=sflag, size = 0x4, scoped, tag = 'scoped memory for tpu_custom_call.1']
    #allocation7 [shape = 'u8[4096]{0}', space=vmem, size = 0x1000, scoped, tag = 'input window, operand 3, single buffered']
    %16 = vsyncpa [#allocation4], 0
    %17 = vsyncpa [#allocation6], 0
    // Predicated region
    $region2: #{tpu_custom_call.1} parent=1 // pred_check
      _
    $region3: #{tpu_custom_call.1} parent=1 // pred_check_branch
      %19 = sbr.rel (0) target = $region5
    $region4: #{tpu_custom_call.1} parent=1 // pred_region
      %s21 = ssub.s32 128, 128
      %22 = vsyncadd [#allocation4], %s21
      %s24 = sshll.u32 [#allocation3], 4
      %s25 = int_to_ptr.vmem [resolvable:$true] %s24
      %27 = dma.hbm_to_vmem [thread:$0]  %s0, 128, %s25, [#allocation4]
    $region5: #{tpu_custom_call.1} parent=1 // pred_fallthru
      _
    // Predicated region
    $region6: #{tpu_custom_call.1} parent=1 // pred_check
      _
    $region7: #{tpu_custom_call.1} parent=1 // pred_check_branch
      %29 = sbr.rel (0) target = $region9
    $region8: #{tpu_custom_call.1} parent=1 // pred_region
      %s31 = ssub.s32 128, 128
      %32 = vsyncadd [#allocation6], %s31
      %s34 = sshll.u32 [#allocation5], 4
      %s35 = int_to_ptr.vmem [resolvable:$true] %s34
      %37 = dma.hbm_to_vmem [thread:$0]  %s1, 128, %s35, [#allocation6]
    $region9: #{tpu_custom_call.1} parent=1 // pred_fallthru
      _
    // Predicated region
    $region10: #{tpu_custom_call.1} parent=1 // pred_check
      _
    $region11: #{tpu_custom_call.1} parent=1 // pred_check_branch
      %39 = sbr.rel (0) target = $region13
    $region12: #{tpu_custom_call.1} parent=1 // pred_region
      _
    $region13: #{tpu_custom_call.1} parent=1 // pred_fallthru
      _
    // Predicated region
    $region14: #{tpu_custom_call.1} parent=1 // pred_check
      _
    $region15: #{tpu_custom_call.1} parent=1 // pred_check_branch
      %41 = sbr.rel (0) target = $region17
    $region16: #{tpu_custom_call.1} parent=1 // pred_region
      %s43 = ssub.s32 128, 128
      %44 = vsyncadd [#allocation6], %s43
      %s46 = sshll.u32 [#allocation7], 4
      %s47 = int_to_ptr.vmem [resolvable:$true] %s46
      %49 = dma.hbm_to_vmem [thread:$0]  %s3, 128, %s47, [#allocation6]
    $region17: #{tpu_custom_call.1} parent=1 // pred_fallthru
      _
    // Predicated region
    $region18: #{tpu_custom_call.1} parent=1 // pred_check
      _
    $region19: #{tpu_custom_call.1} parent=1 // pred_check_branch
      %51 = sbr.rel (0) target = $region21
    $region20: #{tpu_custom_call.1} parent=1 // pred_region
      _
    $region21: #{tpu_custom_call.1} parent=1 // pred_fallthru
      _
    // Predicated region
    $region22: #{tpu_custom_call.1} parent=1 // pred_check
      _
    $region23: #{tpu_custom_call.1} parent=1 // pred_check_branch
      %53 = sbr.rel (0) target = $region25
    $region24: #{tpu_custom_call.1} parent=1 // pred_region
      _
    $region25: #{tpu_custom_call.1} parent=1 // pred_fallthru
      _
    // Predicated region
    $region26: #{tpu_custom_call.1} parent=1 // pred_check
      _
    $region27: #{tpu_custom_call.1} parent=1 // pred_check_branch
      %55 = sbr.rel (0) target = $region29
    $region28: #{tpu_custom_call.1} parent=1 // pred_region
      _
    $region29: #{tpu_custom_call.1} parent=1 // pred_fallthru
      _
    // Predicated region
    $region30: #{tpu_custom_call.1} parent=1 // pred_check
      _
    $region31: #{tpu_custom_call.1} parent=1 // pred_check_branch
      %57 = sbr.rel (0) target = $region33
    $region32: #{tpu_custom_call.1} parent=1 // pred_region
      _
    $region33: #{tpu_custom_call.1} parent=1 // pred_fallthru
      _
    // Predicated region
    $region34: #{tpu_custom_call.1} parent=1 // pred_check
      _
    $region35: #{tpu_custom_call.1} parent=1 // pred_check_branch
      %59 = sbr.rel (0) target = $region37
    $region36: #{tpu_custom_call.1} parent=1 // pred_region
      _
    $region37: #{tpu_custom_call.1} parent=1 // pred_fallthru
      _
    // Predicated region
    $region38: #{tpu_custom_call.1} parent=1 // pred_check
      _
    $region39: #{tpu_custom_call.1} parent=1 // pred_check_branch
      %61 = sbr.rel (0) target = $region41
    $region40: #{tpu_custom_call.1} parent=1 // pred_region
      %62 = dma.done [#allocation4], 128
    $region41: #{tpu_custom_call.1} parent=1 // pred_fallthru
      _
    // Predicated region
    $region42: #{tpu_custom_call.1} parent=1 // pred_check
      _
    $region43: #{tpu_custom_call.1} parent=1 // pred_check_branch
      %64 = sbr.rel (0) target = $region45
    $region44: #{tpu_custom_call.1} parent=1 // pred_region
      %65 = dma.done [#allocation6], 128
    $region45: #{tpu_custom_call.1} parent=1 // pred_fallthru
      _
    // Predicated region
    $region46: #{tpu_custom_call.1} parent=1 // pred_check
      _
    $region47: #{tpu_custom_call.1} parent=1 // pred_check_branch
      %67 = sbr.rel (0) target = $region49
    $region48: #{tpu_custom_call.1} parent=1 // pred_region
      %68 = dma.done [#allocation6], 128
    $region49: #{tpu_custom_call.1} parent=1 // pred_fallthru
      _
    %v69 = vld [vmem:[#allocation3] sm:$0xff]
    %v70 = vld [vmem:[%s2] sm:$0xff]
    %v71 = vld [vmem:[%s2 + $0x8] sm:$0xff]
    %v72 = vld [vmem:[#allocation5] sm:$0xff]
    %v73 = vld [vmem:[#allocation7] sm:$0xff]
    %vm74 = vcmask 64512
    %v76 = vsel %vm74, %v72, 0
    %78 = vmatprep.subr.mxu0 0.0
    %79 = vmatpush1.msra.mxu0 %v73
    %80 = vmatprep.subr.mxu0 0.0
    %81 = vmatpush1.msra.mxu0 0.0
    %82 = vmatprep.subr.mxu0 0.0
    %83 = vmatpush1.msra.mxu0 0.0
    %84 = vmatprep.subr.mxu0 0.0
    %85 = vmatpush1.msra.mxu0 0.0
    %86 = vmatprep.subr.mxu0 0.0
    %87 = vmatpush1.msra.mxu0 0.0
    %88 = vmatprep.subr.mxu0 0.0
    %89 = vmatpush1.msra.mxu0 0.0
    %90 = vmatprep.subr.mxu0 0.0
    %91 = vmatpush1.msra.mxu0 0.0
    %92 = vmatprep.subr.mxu0 0.0
    %93 = vmatpush1.msra.mxu0 0.0
    %94 = vmatprep.subr.mxu0 0.0
    %95 = vmatpush1.msra.mxu0 0.0
    %96 = vmatprep.subr.mxu0 0.0
    %97 = vmatpush1.msra.mxu0 0.0
    %98 = vmatprep.subr.mxu0 0.0
    %99 = vmatpush1.msra.mxu0 0.0
    %100 = vmatprep.subr.mxu0 0.0
    %101 = vmatpush1.msra.mxu0 0.0
    %102 = vmatprep.subr.mxu0 0.0
    %103 = vmatpush1.msra.mxu0 0.0
    %104 = vmatprep.subr.mxu0 0.0
    %105 = vmatpush1.msra.mxu0 0.0
    %106 = vmatprep.subr.mxu0 0.0
    %107 = vmatpush1.msra.mxu0 0.0
    %108 = vmatprep.subr.mxu0 0.0
    %109 = vmatpush1.msra.mxu0 0.0
    %110 = vmatprep.subr.mxu0 0.0
    %111 = vmatpush1.msra.mxu0 0.0
    %112 = vmatprep.subr.mxu0 0.0
    %113 = vmatpush1.msra.mxu0 0.0
    %114 = vmatprep.subr.mxu0 0.0
    %115 = vmatpush1.msra.mxu0 0.0
    %116 = vmatprep.subr.mxu0 0.0
    %117 = vmatpush1.msra.mxu0 0.0
    %118 = vmatprep.subr.mxu0 0.0
    %119 = vmatpush1.msra.mxu0 0.0
    %120 = vmatprep.subr.mxu0 0.0
    %121 = vmatpush1.msra.mxu0 0.0
    %122 = vmatprep.subr.mxu0 0.0
    %123 = vmatpush1.msra.mxu0 0.0
    %124 = vmatprep.subr.mxu0 0.0
    %125 = vmatpush1.msra.mxu0 0.0
    %126 = vmatprep.subr.mxu0 0.0
    %127 = vmatpush1.msra.mxu0 0.0
    %128 = vmatprep.subr.mxu0 0.0
    %129 = vmatpush1.msra.mxu0 0.0
    %130 = vmatprep.subr.mxu0 0.0
    %131 = vmatpush1.msra.mxu0 0.0
    %132 = vmatprep.subr.mxu0 0.0
    %133 = vmatpush1.msra.mxu0 0.0
    %134 = vmatprep.subr.mxu0 0.0
    %135 = vmatpush1.msra.mxu0 0.0
    %136 = vmatprep.subr.mxu0 0.0
    %137 = vmatpush1.msra.mxu0 0.0
    %138 = vmatprep.subr.mxu0 0.0
    %139 = vmatpush1.msra.mxu0 0.0
    %140 = vmatprep.subr.mxu0 0.0
    %141 = vmatpush1.msra.mxu0 0.0
    %142 = vmatprep.mubr.f32.mxu0 0.0
    %143 = vmatmul.mubr.f32.gmra.mrb[0].mxu0 %v76
    %v144 = vpop.f32.mrb[0].mxu0
    %v145 = vadd.f32 0.0, %v144
    %v146 = vpop.f32.mrb[0].mxu0
    %147 = vdwg.mxu0
    %vm148 = vcmask 130048
    %v150 = vsel %vm148, %v69, 0
    %152 = vmatprep.subr.mxu0 0.0
    %153 = vmatpush1.msra.mxu0 %v70
    %154 = vmatprep.subr.mxu0 0.0
    %155 = vmatpush1.msra.mxu0 %v71
    %156 = vmatprep.subr.mxu0 0.0
    %157 = vmatpush1.msra.mxu0 0.0
    %158 = vmatprep.subr.mxu0 0.0
    %159 = vmatpush1.msra.mxu0 0.0
    %160 = vmatprep.subr.mxu0 0.0
    %161 = vmatpush1.msra.mxu0 0.0
    %162 = vmatprep.subr.mxu0 0.0
    %163 = vmatpush1.msra.mxu0 0.0
    %164 = vmatprep.subr.mxu0 0.0
    %165 = vmatpush1.msra.mxu0 0.0
    %166 = vmatprep.subr.mxu0 0.0
    %167 = vmatpush1.msra.mxu0 0.0
    %168 = vmatprep.subr.mxu0 0.0
    %169 = vmatpush1.msra.mxu0 0.0
    %170 = vmatprep.subr.mxu0 0.0
    %171 = vmatpush1.msra.mxu0 0.0
    %172 = vmatprep.subr.mxu0 0.0
    %173 = vmatpush1.msra.mxu0 0.0
    %174 = vmatprep.subr.mxu0 0.0
    %175 = vmatpush1.msra.mxu0 0.0
    %176 = vmatprep.subr.mxu0 0.0
    %177 = vmatpush1.msra.mxu0 0.0
    %178 = vmatprep.subr.mxu0 0.0
    %179 = vmatpush1.msra.mxu0 0.0
    %180 = vmatprep.subr.mxu0 0.0
    %181 = vmatpush1.msra.mxu0 0.0
    %182 = vmatprep.subr.mxu0 0.0
    %183 = vmatpush1.msra.mxu0 0.0
    %184 = vmatprep.subr.mxu0 0.0
    %185 = vmatpush1.msra.mxu0 0.0
    %186 = vmatprep.subr.mxu0 0.0
    %187 = vmatpush1.msra.mxu0 0.0
    %188 = vmatprep.subr.mxu0 0.0
    %189 = vmatpush1.msra.mxu0 0.0
    %190 = vmatprep.subr.mxu0 0.0
    %191 = vmatpush1.msra.mxu0 0.0
    %192 = vmatprep.subr.mxu0 0.0
    %193 = vmatpush1.msra.mxu0 0.0
    %194 = vmatprep.subr.mxu0 0.0
    %195 = vmatpush1.msra.mxu0 0.0
    %196 = vmatprep.subr.mxu0 0.0
    %197 = vmatpush1.msra.mxu0 0.0
    %198 = vmatprep.subr.mxu0 0.0
    %199 = vmatpush1.msra.mxu0 0.0
    %200 = vmatprep.subr.mxu0 0.0
    %201 = vmatpush1.msra.mxu0 0.0
    %202 = vmatprep.subr.mxu0 0.0
    %203 = vmatpush1.msra.mxu0 0.0
    %204 = vmatprep.subr.mxu0 0.0
    %205 = vmatpush1.msra.mxu0 0.0
    %206 = vmatprep.subr.mxu0 0.0
    %207 = vmatpush1.msra.mxu0 0.0
    %208 = vmatprep.subr.mxu0 0.0
    %209 = vmatpush1.msra.mxu0 0.0
    %210 = vmatprep.subr.mxu0 0.0
    %211 = vmatpush1.msra.mxu0 0.0
    %212 = vmatprep.subr.mxu0 0.0
    %213 = vmatpush1.msra.mxu0 0.0
    %214 = vmatprep.subr.mxu0 0.0
    %215 = vmatpush1.msra.mxu0 0.0
    %216 = vmatprep.mubr.f32.mxu0 0.0
    %217 = vmatmul.mubr.f32.gmra.mrb[0].mxu0 %v150
    %v218 = vpop.f32.mrb[0].mxu0
    %v219 = vadd.f32 %v145, %v218
    %v220 = vpop.f32.mrb[0].mxu0
    %221 = vdwg.mxu0
    %v222 = vld [vmem:[%s4] sm:$0x1]
    %v224 = vlaneseq
    %v225 = vshrl.u32 %v224, 7
    %v226 = vsub.s32 0, %v225
    %v227 = vrot.slane %v222, %v226
    %v229 = vadd.f32 %v219, %v227
    %v230 = vmax.f32 %v229, 0.0
    %v231 = vld [vmem:[%s5] sm:$0xff]
    %v232 = vld [vmem:[%s5 + $0x8] sm:$0xff]
    %v233 = vld [vmem:[%s5 + $0x10] sm:$0xff]
    %v234 = vld [vmem:[%s5 + $0x18] sm:$0xff]
    %v235 = vld [vmem:[%s5 + $0x20] sm:$0xff]
    %v236 = vld [vmem:[%s5 + $0x28] sm:$0xff]
    %v237 = vld [vmem:[%s5 + $0x30] sm:$0xff]
    %v238 = vld [vmem:[%s5 + $0x38] sm:$0xff]
    %v239 = vld [vmem:[%s5 + $0x40] sm:$0xff]
    %v240 = vld [vmem:[%s5 + $0x48] sm:$0xff]
    %v241 = vld [vmem:[%s5 + $0x50] sm:$0xff]
    %v242 = vld [vmem:[%s5 + $0x58] sm:$0xff]
    %v243 = vld [vmem:[%s5 + $0x60] sm:$0xff]
    %v244 = vld [vmem:[%s5 + $0x68] sm:$0xff]
    %v245 = vld [vmem:[%s5 + $0x70] sm:$0xff]
    %v246 = vld [vmem:[%s5 + $0x78] sm:$0xff]
    %v247 = vld [vmem:[%s6] sm:$0x1]
    %v249 = vlaneseq
    %v250 = vshrl.u32 %v249, 7
    %v251 = vsub.s32 0, %v250
    %v252 = vrot.slane %v247, %v251
    %254 = vmatprep.subr.mxu0 0.0
    %255 = vmatpush1.msra.mxu0 %v231
    %256 = vmatprep.subr.mxu0 0.0
    %257 = vmatpush1.msra.mxu0 %v232
    %258 = vmatprep.subr.mxu0 0.0
    %259 = vmatpush1.msra.mxu0 %v233
    %260 = vmatprep.subr.mxu0 0.0
    %261 = vmatpush1.msra.mxu0 %v234
    %262 = vmatprep.subr.mxu0 0.0
    %263 = vmatpush1.msra.mxu0 %v235
    %264 = vmatprep.subr.mxu0 0.0
    %265 = vmatpush1.msra.mxu0 %v236
    %266 = vmatprep.subr.mxu0 0.0
    %267 = vmatpush1.msra.mxu0 %v237
    %268 = vmatprep.subr.mxu0 0.0
    %269 = vmatpush1.msra.mxu0 %v238
    %270 = vmatprep.subr.mxu0 0.0
    %271 = vmatpush1.msra.mxu0 %v239
    %272 = vmatprep.subr.mxu0 0.0
    %273 = vmatpush1.msra.mxu0 %v240
    %274 = vmatprep.subr.mxu0 0.0
    %275 = vmatpush1.msra.mxu0 %v241
    %276 = vmatprep.subr.mxu0 0.0
    %277 = vmatpush1.msra.mxu0 %v242
    %278 = vmatprep.subr.mxu0 0.0
    %279 = vmatpush1.msra.mxu0 %v243
    %280 = vmatprep.subr.mxu0 0.0
    %281 = vmatpush1.msra.mxu0 %v244
    %282 = vmatprep.subr.mxu0 0.0
    %283 = vmatpush1.msra.mxu0 %v245
    %284 = vmatprep.subr.mxu0 0.0
    %285 = vmatpush1.msra.mxu0 %v246
    %286 = vmatprep.subr.mxu0 0.0
    %287 = vmatpush1.msra.mxu0 0.0
    %288 = vmatprep.subr.mxu0 0.0
    %289 = vmatpush1.msra.mxu0 0.0
    %290 = vmatprep.subr.mxu0 0.0
    %291 = vmatpush1.msra.mxu0 0.0
    %292 = vmatprep.subr.mxu0 0.0
    %293 = vmatpush1.msra.mxu0 0.0
    %294 = vmatprep.subr.mxu0 0.0
    %295 = vmatpush1.msra.mxu0 0.0
    %296 = vmatprep.subr.mxu0 0.0
    %297 = vmatpush1.msra.mxu0 0.0
    %298 = vmatprep.subr.mxu0 0.0
    %299 = vmatpush1.msra.mxu0 0.0
    %300 = vmatprep.subr.mxu0 0.0
    %301 = vmatpush1.msra.mxu0 0.0
    %302 = vmatprep.subr.mxu0 0.0
    %303 = vmatpush1.msra.mxu0 0.0
    %304 = vmatprep.subr.mxu0 0.0
    %305 = vmatpush1.msra.mxu0 0.0
    %306 = vmatprep.subr.mxu0 0.0
    %307 = vmatpush1.msra.mxu0 0.0
    %308 = vmatprep.subr.mxu0 0.0
    %309 = vmatpush1.msra.mxu0 0.0
    %310 = vmatprep.subr.mxu0 0.0
    %311 = vmatpush1.msra.mxu0 0.0
    %312 = vmatprep.subr.mxu0 0.0
    %313 = vmatpush1.msra.mxu0 0.0
    %314 = vmatprep.subr.mxu0 0.0
    %315 = vmatpush1.msra.mxu0 0.0
    %316 = vmatprep.subr.mxu0 0.0
    %317 = vmatpush1.msra.mxu0 0.0
    %318 = vmatprep.mubr.f32.mxu0 0.0
    %319 = vmatmul.mubr.f32.gmra.mrb[0].mxu0 %v230
    %v320 = vpop.f32.mrb[0].mxu0
    %v321 = vadd.f32 %v252, %v320
    %v322 = vpop.f32.mrb[0].mxu0
    %323 = vdwg.mxu0
    %v324 = vmax.f32 %v321, 0.0
    %v325 = vld [vmem:[%s7] sm:$0xff]
    %v326 = vld [vmem:[%s7 + $0x8] sm:$0xff]
    %v327 = vld [vmem:[%s7 + $0x10] sm:$0xff]
    %v328 = vld [vmem:[%s7 + $0x18] sm:$0xff]
    %v329 = vld [vmem:[%s7 + $0x20] sm:$0xff]
    %v330 = vld [vmem:[%s7 + $0x28] sm:$0xff]
    %v331 = vld [vmem:[%s7 + $0x30] sm:$0xff]
    %v332 = vld [vmem:[%s7 + $0x38] sm:$0xff]
    %v333 = vld [vmem:[%s7 + $0x40] sm:$0xff]
    %v334 = vld [vmem:[%s7 + $0x48] sm:$0xff]
    %v335 = vld [vmem:[%s7 + $0x50] sm:$0xff]
    %v336 = vld [vmem:[%s7 + $0x58] sm:$0xff]
    %v337 = vld [vmem:[%s7 + $0x60] sm:$0xff]
    %v338 = vld [vmem:[%s7 + $0x68] sm:$0xff]
    %v339 = vld [vmem:[%s7 + $0x70] sm:$0xff]
    %v340 = vld [vmem:[%s7 + $0x78] sm:$0xff]
    %v341 = vld [vmem:[#allocation2] sm:$0x1]
    %v343 = vlaneseq
    %v344 = vshrl.u32 %v343, 7
    %v345 = vsub.s32 0, %v344
    %v346 = vrot.slane %v341, %v345
    %348 = vmatprep.subr.mxu0 0.0
    %349 = vmatpush1.msra.mxu0 %v325
    %350 = vmatprep.subr.mxu0 0.0
    %351 = vmatpush1.msra.mxu0 %v326
    %352 = vmatprep.subr.mxu0 0.0
    %353 = vmatpush1.msra.mxu0 %v327
    %354 = vmatprep.subr.mxu0 0.0
    %355 = vmatpush1.msra.mxu0 %v328
    %356 = vmatprep.subr.mxu0 0.0
    %357 = vmatpush1.msra.mxu0 %v329
    %358 = vmatprep.subr.mxu0 0.0
    %359 = vmatpush1.msra.mxu0 %v330
    %360 = vmatprep.subr.mxu0 0.0
    %361 = vmatpush1.msra.mxu0 %v331
    %362 = vmatprep.subr.mxu0 0.0
    %363 = vmatpush1.msra.mxu0 %v332
    %364 = vmatprep.subr.mxu0 0.0
    %365 = vmatpush1.msra.mxu0 %v333
    %366 = vmatprep.subr.mxu0 0.0
    %367 = vmatpush1.msra.mxu0 %v334
    %368 = vmatprep.subr.mxu0 0.0
    %369 = vmatpush1.msra.mxu0 %v335
    %370 = vmatprep.subr.mxu0 0.0
    %371 = vmatpush1.msra.mxu0 %v336
    %372 = vmatprep.subr.mxu0 0.0
    %373 = vmatpush1.msra.mxu0 %v337
    %374 = vmatprep.subr.mxu0 0.0
    %375 = vmatpush1.msra.mxu0 %v338
    %376 = vmatprep.subr.mxu0 0.0
    %377 = vmatpush1.msra.mxu0 %v339
    %378 = vmatprep.subr.mxu0 0.0
    %379 = vmatpush1.msra.mxu0 %v340
    %380 = vmatprep.subr.mxu0 0.0
    %381 = vmatpush1.msra.mxu0 0.0
    %382 = vmatprep.subr.mxu0 0.0
    %383 = vmatpush1.msra.mxu0 0.0
    %384 = vmatprep.subr.mxu0 0.0
    %385 = vmatpush1.msra.mxu0 0.0
    %386 = vmatprep.subr.mxu0 0.0
    %387 = vmatpush1.msra.mxu0 0.0
    %388 = vmatprep.subr.mxu0 0.0
    %389 = vmatpush1.msra.mxu0 0.0
    %390 = vmatprep.subr.mxu0 0.0
    %391 = vmatpush1.msra.mxu0 0.0
    %392 = vmatprep.subr.mxu0 0.0
    %393 = vmatpush1.msra.mxu0 0.0
    %394 = vmatprep.subr.mxu0 0.0
    %395 = vmatpush1.msra.mxu0 0.0
    %396 = vmatprep.subr.mxu0 0.0
    %397 = vmatpush1.msra.mxu0 0.0
    %398 = vmatprep.subr.mxu0 0.0
    %399 = vmatpush1.msra.mxu0 0.0
    %400 = vmatprep.subr.mxu0 0.0
    %401 = vmatpush1.msra.mxu0 0.0
    %402 = vmatprep.subr.mxu0 0.0
    %403 = vmatpush1.msra.mxu0 0.0
    %404 = vmatprep.subr.mxu0 0.0
    %405 = vmatpush1.msra.mxu0 0.0
    %406 = vmatprep.subr.mxu0 0.0
    %407 = vmatpush1.msra.mxu0 0.0
    %408 = vmatprep.subr.mxu0 0.0
    %409 = vmatpush1.msra.mxu0 0.0
    %410 = vmatprep.subr.mxu0 0.0
    %411 = vmatpush1.msra.mxu0 0.0
    %412 = vmatprep.mubr.f32.mxu0 0.0
    %413 = vmatmul.mubr.f32.gmra.mrb[0].mxu0 %v324
    %v414 = vpop.f32.mrb[0].mxu0
    %v415 = vadd.f32 %v346, %v414
    %v416 = vpop.f32.mrb[0].mxu0
    %417 = vdwg.mxu0
    %vm418 = vcmask 7168
    %419 = vst.msk [vmem:[%s9] sm:$0xff] %vm418, %v415
    // Predicated region
    $region50: #{tpu_custom_call.1} parent=1 // pred_check
      _
    $region51: #{tpu_custom_call.1} parent=1 // pred_check_branch
      %421 = sbr.rel (0) target = $region53
    $region52: #{tpu_custom_call.1} parent=1 // pred_region
      _
    $region53: #{tpu_custom_call.1} parent=1 // pred_fallthru
      _
    // Predicated region
    $region54: #{tpu_custom_call.1} parent=1 // pred_check
      _
    $region55: #{tpu_custom_call.1} parent=1 // pred_check_branch
      %423 = sbr.rel (0) target = $region57
    $region56: #{tpu_custom_call.1} parent=1 // pred_region
      _
    $region57: #{tpu_custom_call.1} parent=1 // pred_fallthru
      _
    %424 = vsyncpa [#allocation4], 1
    %425 = vsyncpa [#allocation6], 1

</llo_original>
